<compile_context>
chip_gen: v7x
topology: tpu7x:2x2x1
jax: 0.10.0
libtpu: 0.0.40
codegen_flags: <defaults>
</compile_context>

<pallas_src>
import functools

import jax
import jax.numpy as jnp
from jax.experimental import pallas as pl
from jax.experimental.pallas import tpu as pltpu

SMOOTH = 1.0
_LANES = 128
_TARGET_BLOCK_BYTES = 4 * 1024 * 1024  # per input, per grid step


def _dice_kernel(pred_ref, target_ref, inter_ref, denom_ref, *,
                 rows_total, tile_rows, steps_per_split, need_mask):
    """pred_ref/target_ref: (B, TR, 128); inter_ref/denom_ref: (B, 128)."""
    s = pl.program_id(0)   # parallel slice (megacore)
    k = pl.program_id(1)   # reduction step within the slice

    @pl.when(k == 0)
    def _():
        inter_ref[...] = jnp.zeros_like(inter_ref)
        denom_ref[...] = jnp.zeros_like(denom_ref)

    p = pred_ref[...].astype(jnp.float32)
    t = target_ref[...].astype(jnp.float32)

    if need_mask:
        # Zero out rows past the true extent (partial last block and any
        # fully out-of-range blocks created by the rectangular grid).
        row_start = (s * steps_per_split + k) * tile_rows
        row_ids = jax.lax.broadcasted_iota(jnp.int32, p.shape, dimension=1)
        valid = row_ids < (rows_total - row_start)
        p = jnp.where(valid, p, 0.0)
        t = jnp.where(valid, t, 0.0)

    # Lane-wide partial sums: reduce only the row axis (mostly VPU vreg adds);
    # the cross-lane reduce happens once, outside the kernel.
    inter_ref[...] += jnp.sum(p * t, axis=1)
    denom_ref[...] += jnp.sum(p + t, axis=1)


def dice_loss(pred, target, *, block_rows=None):
    """pred, target: (B, C, H, W) (any trailing shape). Returns scalar f32."""
    assert pred.shape == target.shape
    b = pred.shape[0]
    n = 1
    for d in pred.shape[1:]:
        n *= d

    pred_f = pred.reshape(b, n)
    target_f = target.reshape(b, n)

    rows = pl.cdiv(n, _LANES)
    n128 = rows * _LANES
    if n128 != n:
        # TODO(synk): lane-remainder path still pads to the next multiple of
        # 128 (an HBM copy); only hit when prod(shape[1:]) % 128 != 0.
        pad = ((0, 0), (0, n128 - n))
        pred_f = jnp.pad(pred_f, pad)
        target_f = jnp.pad(target_f, pad)

    # Free (contiguous) reshape to a sublane/lane-dense 3-D view.
    pred_3 = pred_f.reshape(b, rows, _LANES)
    target_3 = target_f.reshape(b, rows, _LANES)

    # Rows per block: target ~4 MiB per input per step, multiple of 8.
    if block_rows is None:
        tr = _TARGET_BLOCK_BYTES // (b * _LANES * 4)
    else:
        tr = block_rows
    tr = max(8, (tr // 8) * 8)
    if tr >= rows:
        tr = rows  # full extent (allowed even if not a multiple of 8)
    # TODO(synk): very large B with tiny per-sample N would also need batch
    # tiling to keep the (B, tr, 128) block inside VMEM.

    num_blocks = pl.cdiv(rows, tr)

    # Split the row-block axis over (up to) 2 TensorCores; each slice gets
    # its own partial-sum output block, combined below.
    n_splits = 2 if num_blocks >= 2 else 1
    steps = pl.cdiv(num_blocks, n_splits)
    total_blocks = n_splits * steps

    need_mask = (num_blocks * tr != rows) or (total_blocks != num_blocks)

    def in_map(s, k):
        blk = s * steps + k
        if total_blocks != num_blocks:
            blk = jnp.minimum(blk, num_blocks - 1)  # extra blocks re-read last
        return (0, blk, 0)

    out_map = lambda s, k: (s, 0, 0)

    kernel = functools.partial(
        _dice_kernel,
        rows_total=rows,
        tile_rows=tr,
        steps_per_split=steps,
        need_mask=need_mask,
    )

    block_bytes = b * tr * _LANES * 4
    # 2 inputs x 2 pipeline buffers + headroom; keep well under v7x 64 MiB.
    vmem_limit = max(32 * 1024 * 1024,
                     min(4 * block_bytes + 4 * 1024 * 1024, 48 * 1024 * 1024))

    itemsize = jnp.dtype(pred.dtype).itemsize
    cost = pl.CostEstimate(
        flops=3 * b * n,
        transcendentals=0,
        bytes_accessed=2 * b * n * itemsize + 2 * n_splits * b * _LANES * 4,
    )

    inter_parts, denom_parts = pl.pallas_call(
        kernel,
        out_shape=(
            jax.ShapeDtypeStruct((n_splits, b, _LANES), jnp.float32),
            jax.ShapeDtypeStruct((n_splits, b, _LANES), jnp.float32),
        ),
        grid_spec=pltpu.PrefetchScalarGridSpec(
            num_scalar_prefetch=0,
            grid=(n_splits, steps),
            in_specs=[
                pl.BlockSpec((b, tr, _LANES), in_map),
                pl.BlockSpec((b, tr, _LANES), in_map),
            ],
            out_specs=(
                pl.BlockSpec((None, b, _LANES), out_map),
                pl.BlockSpec((None, b, _LANES), out_map),
            ),
        ),
        compiler_params=pltpu.CompilerParams(
            dimension_semantics=("parallel", "arbitrary"),
            vmem_limit_bytes=int(vmem_limit),
        ),
        cost_estimate=cost,
    )(pred_3, target_3)

    # Tiny finalize (single cross-lane reduce + dice formula) in plain XLA.
    inter = jnp.sum(inter_parts, axis=(0, 2))   # (B,)
    denom = jnp.sum(denom_parts, axis=(0, 2))   # (B,)
    dice = (2.0 * inter + SMOOTH) / (denom + SMOOTH)
    return 1.0 - jnp.sum(dice) / b


def _dice_loss_ref(pred, target):
    b = pred.shape[0]
    p = pred.reshape(b, -1).astype(jnp.float32)
    t = target.reshape(b, -1).astype(jnp.float32)
    inter = jnp.sum(p * t, axis=1)
    score = (2.0 * inter + SMOOTH) / (jnp.sum(p, axis=1) + jnp.sum(t, axis=1) + SMOOTH)
    return 1.0 - jnp.sum(score) / b


if __name__ == "__main__":
    key = jax.random.PRNGKey(0)

    # Case 1: module-implied shape (B, C, H, W) = (2, 4, 16, 16).
    k1, k2 = jax.random.split(key)
    pred = jax.nn.sigmoid(jax.random.normal(k1, (2, 4, 16, 16), dtype=jnp.float32))
    target = (jax.random.uniform(k2, (2, 4, 16, 16)) > 0.5).astype(jnp.float32)
    loss = jax.block_until_ready(dice_loss(pred, target))
    ref = jax.block_until_ready(_dice_loss_ref(pred, target))
    assert jnp.allclose(loss, ref, atol=1e-5, rtol=1e-5), (loss, ref)

    # Case 2: exercises the dual-slice grid, partial last block and in-kernel
    # row masking (rows=24, forced block_rows=8 -> 3 blocks over 2 slices).
    k3, k4 = jax.random.split(k1)
    pred2 = jax.nn.sigmoid(jax.random.normal(k3, (2, 4, 24, 32), dtype=jnp.float32))
    target2 = (jax.random.uniform(k4, (2, 4, 24, 32)) > 0.5).astype(jnp.float32)
    loss2 = jax.block_until_ready(dice_loss(pred2, target2, block_rows=8))
    ref2 = jax.block_until_ready(_dice_loss_ref(pred2, target2))
    assert jnp.allclose(loss2, ref2, atol=1e-5, rtol=1e-5), (loss2, ref2)

    # Case 3: non-128-aligned flattened size (exercises the remainder path).
    k5, k6 = jax.random.split(k3)
    pred3 = jax.nn.sigmoid(jax.random.normal(k5, (2, 3, 7, 5), dtype=jnp.float32))
    target3 = (jax.random.uniform(k6, (2, 3, 7, 5)) > 0.5).astype(jnp.float32)
    loss3 = jax.block_until_ready(dice_loss(pred3, target3))
    ref3 = jax.block_until_ready(_dice_loss_ref(pred3, target3))
    assert jnp.allclose(loss3, ref3, atol=1e-5, rtol=1e-5), (loss3, ref3)

    print("KERNEL_OK")
</pallas_src>

<mosaic_0001>
module attributes {stable_mosaic.version = 11 : i64} {
  func.func @_dice_kernel(%arg0: i32, %arg1: i32, %arg2: memref<2x8x128xf32, #tpu.memory_space<vmem>>, %arg3: memref<2x8x128xf32, #tpu.memory_space<vmem>>, %arg4: memref<1x2x128xf32, #tpu.memory_space<vmem>>, %arg5: memref<1x2x128xf32, #tpu.memory_space<vmem>>) attributes {dimension_semantics = [#tpu.dimension_semantics<parallel>, #tpu.dimension_semantics<arbitrary>], iteration_bounds = array<i64: 1, 1>, scalar_prefetch = 0 : i64, scratch_operands = 0 : i64, tpu.core_type = #tpu.core_type<tc>, window_params = [{transform_indices = @transform_0, window_bounds = array<i64: 2, 8, 128>}, {transform_indices = @transform_1, window_bounds = array<i64: 2, 8, 128>}, {transform_indices = @transform_2, window_bounds = array<i64: 1, 2, 128>}, {transform_indices = @transform_3, window_bounds = array<i64: 1, 2, 128>}]} {
    %c0_i32 = arith.constant 0 : i32
    %0 = arith.cmpi eq, %arg1, %c0_i32 : i32
    %1 = arith.extui %0 : i1 to i32
    %c0_i32_0 = arith.constant 0 : i32
    %2 = arith.cmpi ne, %1, %c0_i32_0 : i32
    scf.if %2 {
      %cst_19 = arith.constant 0.000000e+00 : f32
      %21 = vector.broadcast %cst_19 : f32 to vector<2x128xf32>
      %c0_20 = arith.constant 0 : index
      %c0_21 = arith.constant 0 : index
      %c0_22 = arith.constant 0 : index
      %22 = vector.load %arg4[%c0_20, %c0_21, %c0_22] : memref<1x2x128xf32, #tpu.memory_space<vmem>>, vector<1x2x128xf32>
      %23 = vector.shape_cast %22 : vector<1x2x128xf32> to vector<2x128xf32>
      %24 = vector.shape_cast %21 : vector<2x128xf32> to vector<1x2x128xf32>
      tpu.vector_store %arg4[%c0_20, %c0_21, %c0_22], %24 {strides = array<i32>} : memref<1x2x128xf32, #tpu.memory_space<vmem>>, vector<1x2x128xf32>,
      %cst_23 = arith.constant 0.000000e+00 : f32
      %25 = vector.broadcast %cst_23 : f32 to vector<2x128xf32>
      %c0_24 = arith.constant 0 : index
      %c0_25 = arith.constant 0 : index
      %c0_26 = arith.constant 0 : index
      %26 = vector.load %arg5[%c0_24, %c0_25, %c0_26] : memref<1x2x128xf32, #tpu.memory_space<vmem>>, vector<1x2x128xf32>
      %27 = vector.shape_cast %26 : vector<1x2x128xf32> to vector<2x128xf32>
      %28 = vector.shape_cast %25 : vector<2x128xf32> to vector<1x2x128xf32>
      tpu.vector_store %arg5[%c0_24, %c0_25, %c0_26], %28 {strides = array<i32>} : memref<1x2x128xf32, #tpu.memory_space<vmem>>, vector<1x2x128xf32>,
    } else {
    }
    %c0 = arith.constant 0 : index
    %c0_1 = arith.constant 0 : index
    %c0_2 = arith.constant 0 : index
    %3 = vector.load %arg2[%c0, %c0_1, %c0_2] : memref<2x8x128xf32, #tpu.memory_space<vmem>>, vector<2x8x128xf32>
    %c0_3 = arith.constant 0 : index
    %c0_4 = arith.constant 0 : index
    %c0_5 = arith.constant 0 : index
    %4 = vector.load %arg3[%c0_3, %c0_4, %c0_5] : memref<2x8x128xf32, #tpu.memory_space<vmem>>, vector<2x8x128xf32>
    %c0_6 = arith.constant 0 : index
    %c0_7 = arith.constant 0 : index
    %c0_8 = arith.constant 0 : index
    %5 = vector.load %arg4[%c0_6, %c0_7, %c0_8] : memref<1x2x128xf32, #tpu.memory_space<vmem>>, vector<1x2x128xf32>
    %6 = vector.shape_cast %5 : vector<1x2x128xf32> to vector<2x128xf32>
    %7 = arith.mulf %3, %4 : vector<2x8x128xf32>
    %cst = arith.constant dense<0.000000e+00> : vector<2x128xf32>
    %8 = vector.multi_reduction <add>, %7, %cst [1] : vector<2x8x128xf32> to vector<2x128xf32>
    %9 = arith.addf %6, %8 : vector<2x128xf32>
    %c0_9 = arith.constant 0 : index
    %c0_10 = arith.constant 0 : index
    %c0_11 = arith.constant 0 : index
    %10 = vector.load %arg4[%c0_9, %c0_10, %c0_11] : memref<1x2x128xf32, #tpu.memory_space<vmem>>, vector<1x2x128xf32>
    %11 = vector.shape_cast %10 : vector<1x2x128xf32> to vector<2x128xf32>
    %12 = vector.shape_cast %9 : vector<2x128xf32> to vector<1x2x128xf32>
    tpu.vector_store %arg4[%c0_9, %c0_10, %c0_11], %12 {strides = array<i32>} : memref<1x2x128xf32, #tpu.memory_space<vmem>>, vector<1x2x128xf32>,
    %c0_12 = arith.constant 0 : index
    %c0_13 = arith.constant 0 : index
    %c0_14 = arith.constant 0 : index
    %13 = vector.load %arg5[%c0_12, %c0_13, %c0_14] : memref<1x2x128xf32, #tpu.memory_space<vmem>>, vector<1x2x128xf32>
    %14 = vector.shape_cast %13 : vector<1x2x128xf32> to vector<2x128xf32>
    %15 = arith.addf %3, %4 : vector<2x8x128xf32>
    %cst_15 = arith.constant dense<0.000000e+00> : vector<2x128xf32>
    %16 = vector.multi_reduction <add>, %15, %cst_15 [1] : vector<2x8x128xf32> to vector<2x128xf32>
    %17 = arith.addf %14, %16 : vector<2x128xf32>
    %c0_16 = arith.constant 0 : index
    %c0_17 = arith.constant 0 : index
    %c0_18 = arith.constant 0 : index
    %18 = vector.load %arg5[%c0_16, %c0_17, %c0_18] : memref<1x2x128xf32, #tpu.memory_space<vmem>>, vector<1x2x128xf32>
    %19 = vector.shape_cast %18 : vector<1x2x128xf32> to vector<2x128xf32>
    %20 = vector.shape_cast %17 : vector<2x128xf32> to vector<1x2x128xf32>
    tpu.vector_store %arg5[%c0_16, %c0_17, %c0_18], %20 {strides = array<i32>} : memref<1x2x128xf32, #tpu.memory_space<vmem>>, vector<1x2x128xf32>,
    return
  }
  func.func @transform_0(%arg0: i32, %arg1: i32) -> (i32, i32, i32) {
    %c1_i32 = arith.constant 1 : i32
    %0 = arith.muli %arg0, %c1_i32 : i32
    %1 = arith.addi %0, %arg1 : i32
    %c0_i32 = arith.constant 0 : i32
    %c0_i32_0 = arith.constant 0 : i32
    %c0_i32_1 = arith.constant 0 : i32
    return %c0_i32, %1, %c0_i32_0 : i32, i32, i32
  }
  func.func @transform_1(%arg0: i32, %arg1: i32) -> (i32, i32, i32) {
    %c1_i32 = arith.constant 1 : i32
    %0 = arith.muli %arg0, %c1_i32 : i32
    %1 = arith.addi %0, %arg1 : i32
    %c0_i32 = arith.constant 0 : i32
    %c0_i32_0 = arith.constant 0 : i32
    %c0_i32_1 = arith.constant 0 : i32
    return %c0_i32, %1, %c0_i32_0 : i32, i32, i32
  }
  func.func @transform_2(%arg0: i32, %arg1: i32) -> (i32, i32, i32) {
    %c0_i32 = arith.constant 0 : i32
    %c0_i32_0 = arith.constant 0 : i32
    %c0_i32_1 = arith.constant 0 : i32
    return %arg0, %c0_i32, %c0_i32_0 : i32, i32, i32
  }
  func.func @transform_3(%arg0: i32, %arg1: i32) -> (i32, i32, i32) {
    %c0_i32 = arith.constant 0 : i32
    %c0_i32_0 = arith.constant 0 : i32
    %c0_i32_1 = arith.constant 0 : i32
    return %arg0, %c0_i32, %c0_i32_0 : i32, i32, i32
  }
}

</mosaic_0001>

<llo_original>
// kernel: tpu_custom_call.1
$region0: #{tpu_custom_call.1}
  #allocation0 [shape = 'u32[]', space=smem, size = 0x4, offset = 0x4, fixed_abs, tag = 'smem constant byte address 0x4 - core index']
  #allocation1 [shape = 'u32[144,128]{1,0:T(1,128)}', space=vmem, size = 0x12000, scoped, tag = 'internal scratch']
  %s0 = inlined_call_operand.hbm [shape: f32[2,8,128], index: 0, kind: input, shape index: {}]
  %s1 = inlined_call_operand.hbm [shape: f32[2,8,128], index: 1, kind: input, shape index: {}]
  %s2 = inlined_call_operand.hbm [shape: f32[1,2,128], index: 2, kind: output, shape index: {0}]
  %s3 = inlined_call_operand.hbm [shape: f32[1,2,128], index: 3, kind: output, shape index: {1}]
  %4 = xla_tuple %s2, %s3
  %s5 = sld [smem:[#allocation0]]
  $region38: #{tpu_custom_call.1} parent=0
    _
  %s7 = ssub.s32 1, %s5
  %s8 = scalar_select 0, %s7, %s5
  $region1: #{tpu_custom_call.1} parent=0
    #allocation2 [shape = 'u8[8192]{0}', space=vmem, size = 0x2000, scoped, tag = 'input window, operand 0, single buffered']
    #allocation3 [shape = 's32[1]{0}', space=sflag, size = 0x4, scoped, tag = 'scoped memory for tpu_custom_call.1']
    #allocation4 [shape = 's32[1]{0}', space=sflag, size = 0x4, scoped, tag = 'scoped memory for tpu_custom_call.1']
    #allocation5 [shape = 'u8[8192]{0}', space=vmem, size = 0x2000, scoped, tag = 'input window, operand 1, single buffered']
    #allocation6 [shape = 's32[1]{0}', space=sflag, size = 0x4, scoped, tag = 'scoped memory for tpu_custom_call.1']
    #allocation7 [shape = 'u8[1024]{0}', space=vmem, size = 0x400, scoped, tag = 'output window, operand 0, single buffered']
    #allocation8 [shape = 'u8[1024]{0}', space=vmem, size = 0x400, scoped, tag = 'output window, operand 1, single buffered']
    #allocation9 [shape = 's32[1]{0}', space=sflag, size = 0x4, scoped, tag = 'scoped memory for tpu_custom_call.1']
    %9 = vsyncpa [#allocation3], 0
    %10 = vsyncpa [#allocation6], 0
    %11 = vsyncpa [#allocation4], 0
    %12 = vsyncpa [#allocation9], 0
    // Predicated region
    $region2: #{tpu_custom_call.1} parent=1 // pred_check
      _
    $region3: #{tpu_custom_call.1} parent=1 // pred_check_branch
      %14 = sbr.rel (0) target = $region5
    $region4: #{tpu_custom_call.1} parent=1 // pred_region
      %s15 = sadd.s32 0, 0
      %s17 = ssub.s32 256, 256
      %18 = vsyncadd [#allocation3], %s17
      %s19 = smul.addr %s15, 128
      %s20 = scalar_lea.hbm %s0, %s19
      %s21 = sshll.u32 [#allocation2], 4
      %s22 = int_to_ptr.vmem [resolvable:$true] %s21
      %27 = dma.hbm_to_vmem [thread:$0]  %s20, 256, %s22, [#allocation3], 128, 128, 8
    $region5: #{tpu_custom_call.1} parent=1 // pred_fallthru
      _
    // Predicated region
    $region6: #{tpu_custom_call.1} parent=1 // pred_check
      _
    $region7: #{tpu_custom_call.1} parent=1 // pred_check_branch
      %29 = sbr.rel (0) target = $region9
    $region8: #{tpu_custom_call.1} parent=1 // pred_region
      %s30 = sadd.s32 0, 0
      %s32 = ssub.s32 256, 256
      %33 = vsyncadd [#allocation6], %s32
      %s34 = smul.addr %s30, 128
      %s35 = scalar_lea.hbm %s1, %s34
      %s36 = sshll.u32 [#allocation5], 4
      %s37 = int_to_ptr.vmem [resolvable:$true] %s36
      %42 = dma.hbm_to_vmem [thread:$0]  %s35, 256, %s37, [#allocation6], 128, 128, 8
    $region9: #{tpu_custom_call.1} parent=1 // pred_fallthru
      _
    // Predicated region
    $region10: #{tpu_custom_call.1} parent=1 // pred_check
      _
    $region11: #{tpu_custom_call.1} parent=1 // pred_check_branch
      %44 = sbr.rel (0) target = $region13
    $region12: #{tpu_custom_call.1} parent=1 // pred_region
      %45 = dma.done [#allocation3], 256
    $region13: #{tpu_custom_call.1} parent=1 // pred_fallthru
      _
    // Predicated region
    $region14: #{tpu_custom_call.1} parent=1 // pred_check
      _
    $region15: #{tpu_custom_call.1} parent=1 // pred_check_branch
      %47 = sbr.rel (0) target = $region17
    $region16: #{tpu_custom_call.1} parent=1 // pred_region
      %48 = dma.done [#allocation6], 256
    $region17: #{tpu_custom_call.1} parent=1 // pred_fallthru
      _
    %s49 = sadd.s32 0, 0
    %s50 = sadd.s32 0, 0
    %p51 = scmp.eq.s32.totalorder 0, 0
    // Predicated region
    $region18: #{tpu_custom_call.1} parent=1 // pred_check
      %p52 = pneg %p51
    $region19: #{tpu_custom_call.1} parent=1 // pred_check_branch
      %54 = sbr.rel (%p52) target = $region21
    $region20: #{tpu_custom_call.1} parent=1 // pred_region
      %55 = vst [vmem:[#allocation7] sm:$0x3] 0.0
      %56 = vst [vmem:[#allocation8] sm:$0x3] 0.0
    $region21: #{tpu_custom_call.1} parent=1 // pred_fallthru
      _
    %v57 = vld [vmem:[#allocation2] sm:$0xff]
    %v58 = vld [vmem:[#allocation2 + $0x8] sm:$0xff]
    %v59 = vld [vmem:[#allocation5] sm:$0xff]
    %v60 = vld [vmem:[#allocation5 + $0x8] sm:$0xff]
    %v61 = vld [vmem:[#allocation7] sm:$0x3]
    %v62 = vmul.f32 %v57, %v59
    %v63 = vmul.f32 %v58, %v60
    %v64 = vrot.slane %v62, 4
    %v65 = vadd.f32 %v62, %v64
    %v66 = vrot.slane %v65, 2
    %v67 = vadd.f32 %v65, %v66
    %v68 = vrot.slane %v67, 1
    %v69 = vadd.f32 %v67, %v68
    %v70 = vrot.slane %v63, 4
    %v71 = vadd.f32 %v63, %v70
    %v72 = vrot.slane %v71, 2
    %v73 = vadd.f32 %v71, %v72
    %v74 = vrot.slane %v73, 1
    %v75 = vadd.f32 %v73, %v74
    %vm78 = vcmask 1041409
    %v79 = vsel %vm78, %v75, %v69
    %v81 = vadd.f32 %v61, %v79
    %82 = vst [vmem:[#allocation7] sm:$0x3] %v81
    %v83 = vld [vmem:[#allocation8] sm:$0x3]
    %v84 = vadd.f32 %v57, %v59
    %v85 = vadd.f32 %v58, %v60
    %v86 = vrot.slane %v84, 4
    %v87 = vadd.f32 %v84, %v86
    %v88 = vrot.slane %v87, 2
    %v89 = vadd.f32 %v87, %v88
    %v90 = vrot.slane %v89, 1
    %v91 = vadd.f32 %v89, %v90
    %v92 = vrot.slane %v85, 4
    %v93 = vadd.f32 %v85, %v92
    %v94 = vrot.slane %v93, 2
    %v95 = vadd.f32 %v93, %v94
    %v96 = vrot.slane %v95, 1
    %v97 = vadd.f32 %v95, %v96
    %v100 = vsel %vm78, %v97, %v91
    %v102 = vadd.f32 %v83, %v100
    %103 = vst [vmem:[#allocation8] sm:$0x3] %v102
    // Predicated region
    $region22: #{tpu_custom_call.1} parent=1 // pred_check
      _
    $region23: #{tpu_custom_call.1} parent=1 // pred_check_branch
      %105 = sbr.rel (0) target = $region25
    $region24: #{tpu_custom_call.1} parent=1 // pred_region
      %s107 = ssub.s32 32, 32
      %108 = vsyncadd [#allocation4], %s107
      %s110 = sshll.u32 [#allocation7], 4
      %s111 = int_to_ptr.vmem [resolvable:$true] %s110
      %113 = dma.vmem_to_hbm [thread:$0]  %s111, 32, %s2, [#allocation4]
    $region25: #{tpu_custom_call.1} parent=1 // pred_fallthru
      _
    // Predicated region
    $region26: #{tpu_custom_call.1} parent=1 // pred_check
      _
    $region27: #{tpu_custom_call.1} parent=1 // pred_check_branch
      %115 = sbr.rel (0) target = $region29
    $region28: #{tpu_custom_call.1} parent=1 // pred_region
      %s117 = ssub.s32 32, 32
      %118 = vsyncadd [#allocation9], %s117
      %s120 = sshll.u32 [#allocation8], 4
      %s121 = int_to_ptr.vmem [resolvable:$true] %s120
      %123 = dma.vmem_to_hbm [thread:$0]  %s121, 32, %s3, [#allocation9]
    $region29: #{tpu_custom_call.1} parent=1 // pred_fallthru
      _
    // Predicated region
    $region30: #{tpu_custom_call.1} parent=1 // pred_check
      _
    $region31: #{tpu_custom_call.1} parent=1 // pred_check_branch
      %125 = sbr.rel (0) target = $region33
    $region32: #{tpu_custom_call.1} parent=1 // pred_region
      %126 = dma.done [#allocation4], 32
    $region33: #{tpu_custom_call.1} parent=1 // pred_fallthru
      _
    // Predicated region
    $region34: #{tpu_custom_call.1} parent=1 // pred_check
      _
    $region35: #{tpu_custom_call.1} parent=1 // pred_check_branch
      %128 = sbr.rel (0) target = $region37
    $region36: #{tpu_custom_call.1} parent=1 // pred_region
      %129 = dma.done [#allocation9], 32
    $region37: #{tpu_custom_call.1} parent=1 // pred_fallthru
      _
    %130 = vsyncpa [#allocation3], 1
    %131 = vsyncpa [#allocation6], 1
    %132 = vsyncpa [#allocation4], 1
    %133 = vsyncpa [#allocation9], 1

</llo_original>
